<compile_context>
chip_gen: v7x
topology: tpu7x:2x2x1
jax: 0.10.0
libtpu: 0.0.40
codegen_flags: <defaults>
</compile_context>

<pallas_src>
import math
import functools

import jax
import jax.numpy as jnp
from jax.experimental import pallas as pl
from jax.experimental.pallas import tpu as pltpu


def _bias_relu_kernel(h_ref, b_ref, o_ref):
    # h_ref : (TILE_R, C) VMEM tile of (lane-dense) node features
    # b_ref : (1, C)      VMEM bias row, resident across grid steps
    # o_ref : (TILE_R, C) output tile
    h = h_ref[...].astype(jnp.float32)
    b = b_ref[...].astype(jnp.float32)           # (1, C) broadcasts over rows
    o_ref[...] = jnp.maximum(h + b, 0.0).astype(o_ref.dtype)


def _pick_tile_rows(num_rows, desired):
    # A single block covering the whole array is always a legal block shape;
    # otherwise use `desired` (a multiple of 8) and let Pallas mask the tail.
    return num_rows if num_rows <= desired else desired


def _run(h2d, bias_row, tile_rows):
    rows, cols = h2d.shape
    grid = (pl.cdiv(rows, tile_rows),)
    return pl.pallas_call(
        _bias_relu_kernel,
        out_shape=jax.ShapeDtypeStruct((rows, cols), h2d.dtype),
        grid_spec=pltpu.PrefetchScalarGridSpec(
            num_scalar_prefetch=0,
            grid=grid,
            in_specs=[
                pl.BlockSpec((tile_rows, cols), lambda i: (i, 0)),  # feature tile
                pl.BlockSpec((1, cols), lambda i: (0, 0)),          # bias (resident)
            ],
            out_specs=pl.BlockSpec((tile_rows, cols), lambda i: (i, 0)),
        ),
        compiler_params=pltpu.CompilerParams(
            dimension_semantics=("parallel",),    # shards grid across TCs on v7x
            vmem_limit_bytes=32 * 1024 * 1024,    # explicit; safe on v5e..v7x
        ),
    )(h2d, bias_row)


@functools.partial(jax.jit, static_argnames=("tile_rows",))
def node_apply(h, bias, *, tile_rows=2048):
    """h: (N, F), bias: (F,) -> ReLU(h + bias), shape (N, F)."""
    N, F = h.shape
    bias = bias.astype(h.dtype)
    lane = 128

    if F % lane == 0 or lane % F == 0:
        # Lane-dense path: view (N, F) as (rows, cols) with cols a multiple
        # of 128 so loads/stores use all lanes.
        if F % lane == 0:
            cols = F
            bias_row = bias.reshape(1, F)
        else:
            cols = lane
            bias_row = jnp.tile(bias, lane // F).reshape(1, lane)
        total = N * F
        pad = (-total) % cols
        flat = h.reshape(total)
        if pad:
            flat = jnp.pad(flat, (0, pad))
        rows = (total + pad) // cols
        h2d = flat.reshape(rows, cols)
        tr = _pick_tile_rows(rows, tile_rows)
        out2d = _run(h2d, bias_row, tr)
        return out2d.reshape(rows * cols)[:total].reshape(N, F)

    # Fallback: F neither divides nor is divided by 128; keep (N, F) layout
    # (a block last-dim equal to the full array dim is always legal).
    tr = _pick_tile_rows(N, tile_rows)
    return _run(h, bias.reshape(1, F), tr)


if __name__ == "__main__":
    # Small, module-consistent shapes: 16 nodes, out_feats = 32.
    N, out_feats = 16, 32

    key = jax.random.PRNGKey(0)
    k_h, k_b = jax.random.split(key)

    # Deterministic parameter init matching reset_parameters():
    # bias ~ Uniform(-stdv, stdv), stdv = 1/sqrt(out_feats)
    stdv = 1.0 / math.sqrt(out_feats)
    bias = jax.random.uniform(
        k_b, (out_feats,), dtype=jnp.float32, minval=-stdv, maxval=stdv
    )

    # Example node feature matrix (what nodes.data['h'] would hold).
    h = jax.random.normal(k_h, (N, out_feats), dtype=jnp.float32)

    out = jax.block_until_ready(node_apply(h, bias))

    # Pure-JAX reference check of the forward pass.
    ref = jnp.maximum(h + bias[None, :], 0.0)
    assert out.shape == (N, out_feats)
    assert out.dtype == jnp.float32
    assert bool(jnp.allclose(out, ref, atol=1e-6, rtol=1e-6))

    print("KERNEL_OK")
</pallas_src>

<mosaic_0001>
module attributes {stable_mosaic.version = 11 : i64} {
  func.func @_bias_relu_kernel(%arg0: i32, %arg1: memref<4x128xf32, #tpu.memory_space<vmem>>, %arg2: memref<1x128xf32, #tpu.memory_space<vmem>>, %arg3: memref<4x128xf32, #tpu.memory_space<vmem>>) attributes {dimension_semantics = [#tpu.dimension_semantics<parallel>], iteration_bounds = array<i64: 1>, scalar_prefetch = 0 : i64, scratch_operands = 0 : i64, tpu.core_type = #tpu.core_type<tc>, window_params = [{transform_indices = @transform_0, window_bounds = array<i64: 4, 128>}, {pipeline_mode = #tpu.pipeline_mode<synchronous>, transform_indices = @transform_1, window_bounds = array<i64: 1, 128>}, {transform_indices = @transform_2, window_bounds = array<i64: 4, 128>}]} {
    %c0 = arith.constant 0 : index
    %c0_0 = arith.constant 0 : index
    %0 = vector.load %arg1[%c0, %c0_0] : memref<4x128xf32, #tpu.memory_space<vmem>>, vector<4x128xf32>
    %c0_1 = arith.constant 0 : index
    %c0_2 = arith.constant 0 : index
    %1 = vector.load %arg2[%c0_1, %c0_2] : memref<1x128xf32, #tpu.memory_space<vmem>>, vector<1x128xf32>
    %2 = vector.broadcast %1 : vector<1x128xf32> to vector<4x128xf32>
    %3 = arith.addf %0, %2 : vector<4x128xf32>
    %cst = arith.constant 0.000000e+00 : f32
    %4 = vector.broadcast %cst : f32 to vector<4x128xf32>
    %5 = arith.maximumf %3, %4 : vector<4x128xf32>
    %c0_3 = arith.constant 0 : index
    %c0_4 = arith.constant 0 : index
    %6 = vector.load %arg3[%c0_3, %c0_4] : memref<4x128xf32, #tpu.memory_space<vmem>>, vector<4x128xf32>
    tpu.vector_store %arg3[%c0_3, %c0_4], %5 {strides = array<i32>} : memref<4x128xf32, #tpu.memory_space<vmem>>, vector<4x128xf32>,
    return
  }
  func.func @transform_0(%arg0: i32) -> (i32, i32) {
    %c0_i32 = arith.constant 0 : i32
    %c0_i32_0 = arith.constant 0 : i32
    return %arg0, %c0_i32 : i32, i32
  }
  func.func @transform_1(%arg0: i32) -> (i32, i32) {
    %c0_i32 = arith.constant 0 : i32
    %c0_i32_0 = arith.constant 0 : i32
    %c0_i32_1 = arith.constant 0 : i32
    return %c0_i32, %c0_i32_0 : i32, i32
  }
  func.func @transform_2(%arg0: i32) -> (i32, i32) {
    %c0_i32 = arith.constant 0 : i32
    %c0_i32_0 = arith.constant 0 : i32
    return %arg0, %c0_i32 : i32, i32
  }
}

</mosaic_0001>

<llo_original>
// kernel: tile.8
$region0: #{tile.8}
  #allocation0 [shape = 's32[1]{0}', space=sflag, size = 0x4, scoped, tag = 'scoped memory for tile.8']
  %s0 = inlined_call_operand.vmem [shape: f32[32], index: 0, kind: input, shape index: {}]
  %s1 = inlined_call_operand.vmem [shape: f32[4,32], index: 1, kind: output, shape index: {}]
  // Predicated region
  $region2: #{tile.8} parent=0 // pred_check
    _
  $region3: #{tile.8} parent=0 // pred_check_branch
    %3 = sbr.rel (0) target = $region5
  $region4: #{tile.8} parent=0 // pred_region
    _
  $region5: #{tile.8} parent=0 // pred_fallthru
    _
  %v4 = vld [vmem:[%s0] ss:$0 sm:$0xff]
  %5 = vst [vmem:[%s1] sm:$0xf] %v4

// kernel: tile.9
$region0: #{tile.9}
  %s0 = inlined_call_operand.vmem [shape: f32[4,32], index: 0, kind: input, shape index: {}]
  %s1 = inlined_call_operand.vmem [shape: f32[1,128], index: 1, kind: output, shape index: {}]
  $region1: #{tile.9} parent=0
    #allocation0 [shape = 'u8[4096]{0}', space=vmem, size = 0x1000, scoped, tag = 'scoped mem for output reshape']
    #allocation1 [shape = 'u8[4096]{0}', space=vmem, size = 0x1000, scoped, tag = 'scoped mem for input reshape']
    %s3 = sshllo.u32 0, 4
    %v4 = vld [vmem:[%s0] sm:%s3]
    %5 = vst [vmem:[#allocation1] sm:%s3] %v4
    %v6 = vld [vmem:[#allocation1] sm:$0x1]
    %vm7 = vcmask 261120
    %8 = vst.msk [vmem:[#allocation0] sm:$0x1] %vm7, %v6
    %s9 = scalar_lea.vmem [#allocation1], 3
    %v10 = vld [vmem:[%s9] sm:$0x1]
    %11 = vrot.lane.b32.xlu0 %v10, 96
    %v12 = vpop.permute.xlu0 %11
    %vm13 = vcmask 1048320
    %14 = vst.msk [vmem:[#allocation0] sm:$0x1] %vm13, %v12
    %s15 = scalar_lea.vmem [#allocation1], 2
    %v16 = vld [vmem:[%s15] sm:$0x1]
    %17 = vrot.lane.b32.xlu0 %v16, 64
    %v18 = vpop.permute.xlu0 %17
    %vm19 = vcmask 785920
    %20 = vst.msk [vmem:[#allocation0] sm:$0x1] %vm19, %v18
    %s21 = scalar_lea.vmem [#allocation1], 1
    %v22 = vld [vmem:[%s21] sm:$0x1]
    %23 = vrot.lane.b32.xlu0 %v22, 32
    %v24 = vpop.permute.xlu0 %23
    %vm25 = vcmask 523520
    %26 = vst.msk [vmem:[#allocation0] sm:$0x1] %vm25, %v24
    %s28 = sshllo.u32 0, 1
    %v30 = vld [vmem:[#allocation0] sm:%s28]
    %s31 = sshllo.u32 0, 1
    %32 = vst [vmem:[%s1] sm:%s31] %v30

// kernel: node_apply.1
$region0: #{node_apply.1}
  #allocation0 [shape = 'u32[]', space=smem, size = 0x4, offset = 0x4, fixed_abs, tag = 'smem constant byte address 0x4 - core index']
  #allocation1 [shape = 'u32[144,128]{1,0:T(1,128)}', space=vmem, size = 0x12000, scoped, tag = 'internal scratch']
  %s0 = inlined_call_operand.vmem [shape: f32[4,128], index: 0, kind: input, shape index: {}]
  %s1 = inlined_call_operand.vmem [shape: f32[1,128], index: 1, kind: input, shape index: {}]
  %s2 = inlined_call_operand.vmem [shape: f32[4,128], index: 2, kind: output, shape index: {}]
  %s3 = sld [smem:[#allocation0]]
  $region18: #{node_apply.1} parent=0
    _
  %s5 = ssub.s32 1, %s3
  %s6 = scalar_select 0, %s5, %s3
  // Predicated region
  $region2: #{node_apply.1} parent=0 // pred_check
    _
  $region3: #{node_apply.1} parent=0 // pred_check_branch
    %8 = sbr.rel (0) target = $region5
  $region4: #{node_apply.1} parent=0 // pred_region
    _
  $region5: #{node_apply.1} parent=0 // pred_fallthru
    _
  // Predicated region
  $region6: #{node_apply.1} parent=0 // pred_check
    _
  $region7: #{node_apply.1} parent=0 // pred_check_branch
    %10 = sbr.rel (0) target = $region9
  $region8: #{node_apply.1} parent=0 // pred_region
    _
  $region9: #{node_apply.1} parent=0 // pred_fallthru
    _
  %v11 = vld [vmem:[%s0] sm:$0xf]
  %v12 = vld [vmem:[%s1] sm:$0x1]
  %v14 = vlaneseq
  %v15 = vshrl.u32 %v14, 7
  %v16 = vsub.s32 0, %v15
  %v17 = vrot.slane %v12, %v16
  %v19 = vadd.f32 %v11, %v17
  %v20 = vmax.f32 %v19, 0.0
  %21 = vst [vmem:[%s2] sm:$0xf] %v20
  // Predicated region
  $region10: #{node_apply.1} parent=0 // pred_check
    _
  $region11: #{node_apply.1} parent=0 // pred_check_branch
    %23 = sbr.rel (0) target = $region13
  $region12: #{node_apply.1} parent=0 // pred_region
    _
  $region13: #{node_apply.1} parent=0 // pred_fallthru
    _
  // Predicated region
  $region14: #{node_apply.1} parent=0 // pred_check
    _
  $region15: #{node_apply.1} parent=0 // pred_check_branch
    %25 = sbr.rel (0) target = $region17
  $region16: #{node_apply.1} parent=0 // pred_region
    _
  $region17: #{node_apply.1} parent=0 // pred_fallthru
    _

</llo_original>
